<compile_context>
chip_gen: v6e
topology: v6e:2x2x1
jax: 0.10.0
libtpu: 0.0.40
codegen_flags: <defaults>
</compile_context>

<pallas_src>
import functools

import jax
import jax.numpy as jnp
from jax.experimental import pallas as pl
from jax.experimental.pallas import tpu as pltpu


def _round_up(n, m):
    return (n + m - 1) // m * m


# ---------------------------------------------------------------------------
# Kernel bodies
# ---------------------------------------------------------------------------

def _attention_tile(q, k, v_aug, *, c_v, l_valid, exp_bf16):
    """Global-softmax attention for one query tile of one batch element.

    q     : (ck_pad, TQ)   f32  (softmax scale already folded into the weights)
    k     : (ck_pad, L)    bf16
    v_aug : (va_pad, L)    bf16 (row c_v is the all-ones row -> softmax denom)
    returns (c_v, TQ) f32 normalized context, lane-major in the query axis.
    """
    l_pad = k.shape[-1]
    # sim[i, j] = q[:, i] . k[:, j]; contraction over the tiny channel dim, the
    # LHS "transpose" folds into the MXU feed (no XLU transpose pass).
    sim = jax.lax.dot_general(
        q.astype(jnp.bfloat16), k, (((0,), (0,)), ((), ())),
        preferred_element_type=jnp.float32)                        # (TQ, L) f32

    if l_valid != l_pad:
        # Mask padded key columns out of the softmax (numerator AND denominator).
        col = jax.lax.broadcasted_iota(jnp.int32, sim.shape, 1)
        sim = jnp.where(col < l_valid, sim, jnp.float32(-1e30))

    # Stabilized, un-normalized softmax (normalization deferred via ones-row).
    z = sim - jnp.max(sim, axis=-1, keepdims=True)
    if exp_bf16:
        p = jnp.exp(z.astype(jnp.bfloat16))        # bf16 EUP exp (v6e / v7x)
    else:
        p = jnp.exp(z).astype(jnp.bfloat16)        # f32 exp (v5e and older)

    # ctx[c, i] = sum_j v_aug[c, j] * p[i, j]; the all-ones row of v_aug makes
    # ctx[c_v, :] the softmax row-sums, already lane-major in i.
    ctx = jax.lax.dot_general(v_aug, p, (((1,), (1,)), ((), ())),
                              preferred_element_type=jnp.float32)  # (va_pad, TQ)
    inv = pl.reciprocal(ctx[c_v:c_v + 1, :], approx=True)          # (1, TQ) EUP
    return ctx[0:c_v, :] * inv


def _pam_kernel_fused(x_ref, w_ref, b_ref, o_ref, *, ck_pad, c_v, l_valid,
                      exp_bf16):
    """Single query tile (TQ == L_pad): one fused [q|k|v|ones] projection."""
    w = w_ref[...]                                  # (R, Cin)  bf16
    bias = b_ref[...]                               # (R, 1)    f32
    for b in range(x_ref.shape[0]):                 # static unroll over B_BLK
        xb = x_ref[b].astype(jnp.bfloat16)          # f32 -> bf16 on the VPU
        qkv = jnp.dot(w, xb, preferred_element_type=jnp.float32) + bias
        q = qkv[0:ck_pad]                                           # (8, L)
        k = qkv[ck_pad:2 * ck_pad].astype(jnp.bfloat16)             # (8, L)
        v_aug = qkv[2 * ck_pad:].astype(jnp.bfloat16)               # (va_pad, L)
        ctx = _attention_tile(q, k, v_aug, c_v=c_v, l_valid=l_valid,
                              exp_bf16=exp_bf16)
        o_ref[b] = ctx.astype(o_ref.dtype)


def _pam_kernel_tiled(x_ref, xq_ref, w_ref, b_ref, o_ref, *, ck_pad, c_v,
                      l_valid, exp_bf16):
    """Query-tiled path: tiny k / v_aug projection recomputed per query tile."""
    w = w_ref[...]                                  # (R, Cin)  bf16
    bias = b_ref[...]                               # (R, 1)    f32
    w_q, b_q = w[0:ck_pad], bias[0:ck_pad]
    w_kv, b_kv = w[ck_pad:], bias[ck_pad:]
    for b in range(x_ref.shape[0]):
        xb = x_ref[b].astype(jnp.bfloat16)          # (Cin, L_pad)
        kv = jnp.dot(w_kv, xb, preferred_element_type=jnp.float32) + b_kv
        k = kv[0:ck_pad].astype(jnp.bfloat16)
        v_aug = kv[ck_pad:].astype(jnp.bfloat16)
        xq = xq_ref[b].astype(jnp.bfloat16)         # (Cin, TQ)
        q = jnp.dot(w_q, xq, preferred_element_type=jnp.float32) + b_q
        ctx = _attention_tile(q, k, v_aug, c_v=c_v, l_valid=l_valid,
                              exp_bf16=exp_bf16)
        o_ref[b] = ctx.astype(o_ref.dtype)


# ---------------------------------------------------------------------------
# Host-side sizing helpers
# ---------------------------------------------------------------------------

def _vmem_capacity_bytes():
    try:
        return int(pltpu.get_tpu_info().vmem_capacity_bytes)
    except Exception:
        return 64 * 1024 * 1024


def _exp_in_bf16():
    # bf16 EUP only on v6e / v7x; keep f32 exp everywhere else.
    try:
        kind = jax.devices()[0].device_kind.lower()
    except Exception:
        return False
    return ("v6" in kind) or ("v7" in kind)


def _step_vmem_bytes(b_blk, tq, c_in, c_v, r, l_pad, out_bytes, tiled):
    """Rough VMEM footprint of one grid step (double-buffered I/O + live temps)."""
    x_in = 2 * b_blk * c_in * l_pad * 4
    xq_in = 2 * b_blk * c_in * tq * 4 if tiled else 0
    out = 2 * b_blk * c_v * tq * out_bytes
    wgt = 2 * (r * c_in * 2 + r * 128 * 4)
    per_el = (tq * l_pad * (4 + 2 + 4)      # sim f32 + p bf16 + exp/mask temp
              + r * l_pad * 6               # projection f32 + bf16 copies
              + r * tq * 6)                 # q / ctx tiles
    return x_in + xq_in + out + wgt + b_blk * per_el + (1 << 20)


def _choose_tiling(n, c_in, c_v, r, l_pad, out_bytes, budget):
    tq_candidates = [l_pad] + [t for t in (2048, 1024, 512, 256, 128)
                               if t < l_pad and l_pad % t == 0]
    tq = tq_candidates[-1]
    for t in tq_candidates:
        if _step_vmem_bytes(1, t, c_in, c_v, r, l_pad, out_bytes,
                            t != l_pad) <= budget:
            tq = t
            break
    b_blk = 1
    for d in range(min(n, 8), 0, -1):
        if n % d == 0 and _step_vmem_bytes(d, tq, c_in, c_v, r, l_pad,
                                           out_bytes, tq != l_pad) <= budget:
            b_blk = d
            break
    return b_blk, tq


# ---------------------------------------------------------------------------
# Wrapper
# ---------------------------------------------------------------------------

def pam_block_forward(x_nchw, wq, bq, wk, bk, wv, bv, *, out_dtype=jnp.float32):
    """_PAMBlock forward (scale=1, ds=1).

    x_nchw : (N, Cin, H, 2*w) float32
    wq, wk : (Ck, Cin) 1x1-conv weights with BatchNorm folded in; bq, bk: (Ck,)
    wv, bv : (Cv, Cin), (Cv,)  plain 1x1 conv (f_value has no BN)
    returns: (N, Cv, H, 2*w) context (out_dtype, default f32)
    """
    n, c_in, h, w_full = x_nchw.shape
    l = h * w_full
    l_pad = _round_up(l, 128)
    c_k = wq.shape[0]
    c_v = wv.shape[0]
    ck_pad = _round_up(c_k, 8)
    va_pad = _round_up(c_v + 1, 8)          # [v | ones | zero-pad] block rows
    r = 2 * ck_pad + va_pad

    scale = c_k ** -0.5
    # Pack [scale*Wq | Wk | Wv | ones-row | zero-pad]; all padded rows have zero
    # weight AND zero bias so they contribute exactly 0 to sim / ctx.
    w_p = jnp.zeros((r, c_in), jnp.float32)
    b_p = jnp.zeros((r, 1), jnp.float32)
    w_p = w_p.at[0:c_k].set(wq * scale)
    b_p = b_p.at[0:c_k, 0].set(bq * scale)
    w_p = w_p.at[ck_pad:ck_pad + c_k].set(wk)
    b_p = b_p.at[ck_pad:ck_pad + c_k, 0].set(bk)
    w_p = w_p.at[2 * ck_pad:2 * ck_pad + c_v].set(wv)
    b_p = b_p.at[2 * ck_pad:2 * ck_pad + c_v, 0].set(bv)
    b_p = b_p.at[2 * ck_pad + c_v, 0].set(1.0)   # all-ones value row -> row-sum
    w_p_bf = w_p.astype(jnp.bfloat16)

    # Channel-major, lane-dense input: a pure reshape of NCHW (stays f32 — the
    # bf16 cast happens on the VPU inside the kernel, saving an HBM pass).
    x_cl = x_nchw.reshape(n, c_in, l)
    if l_pad != l:
        x_cl = jnp.pad(x_cl, ((0, 0), (0, 0), (0, l_pad - l)))

    out_bytes = jnp.dtype(out_dtype).itemsize
    cap = _vmem_capacity_bytes()
    budget = min(int(cap * 0.55), 96 * 1024 * 1024)
    b_blk, tq = _choose_tiling(n, c_in, c_v, r, l_pad, out_bytes, budget)
    n_qt = l_pad // tq
    tiled = n_qt > 1
    exp_bf16 = _exp_in_bf16()

    need = _step_vmem_bytes(b_blk, tq, c_in, c_v, r, l_pad, out_bytes, tiled)
    vmem_limit = int(min(cap, max(16 * 1024 * 1024, 2 * need)))

    grid = (n // b_blk, n_qt)
    x_spec = pl.BlockSpec((b_blk, c_in, l_pad), lambda b, q: (b, 0, 0))
    w_spec = pl.BlockSpec((r, c_in), lambda b, q: (0, 0))       # resident
    bias_spec = pl.BlockSpec((r, 1), lambda b, q: (0, 0))       # resident
    out_spec = pl.BlockSpec((b_blk, c_v, tq), lambda b, q: (b, 0, q))

    common = dict(ck_pad=ck_pad, c_v=c_v, l_valid=l, exp_bf16=exp_bf16)
    if tiled:
        kernel = functools.partial(_pam_kernel_tiled, **common)
        xq_spec = pl.BlockSpec((b_blk, c_in, tq), lambda b, q: (b, 0, q))
        in_specs = [x_spec, xq_spec, w_spec, bias_spec]
        operands = (x_cl, x_cl, w_p_bf, b_p)
    else:
        kernel = functools.partial(_pam_kernel_fused, **common)
        in_specs = [x_spec, w_spec, bias_spec]
        operands = (x_cl, w_p_bf, b_p)

    flops = 2 * n * (n_qt * r * c_in * l_pad
                     + l_pad * l_pad * (ck_pad + va_pad))
    cost = pl.CostEstimate(
        flops=flops,
        transcendentals=n * l_pad * (l_pad + 1),
        bytes_accessed=(x_cl.size * 4 * (2 if tiled else 1)
                        + w_p_bf.size * 2 + b_p.size * 4
                        + n * c_v * l_pad * out_bytes))

    out_cl = pl.pallas_call(
        kernel,
        out_shape=jax.ShapeDtypeStruct((n, c_v, l_pad), out_dtype),
        grid=grid,
        in_specs=in_specs,
        out_specs=out_spec,
        compiler_params=pltpu.CompilerParams(
            dimension_semantics=("parallel", "parallel"),
            vmem_limit_bytes=vmem_limit),
        cost_estimate=cost,
    )(*operands)

    out_cl = out_cl[:, :, :l]
    return out_cl.reshape(n, c_v, h, w_full)


# ---------------------------------------------------------------------------
# Reference + test
# ---------------------------------------------------------------------------

def _fold_conv_bn(w_conv, b_conv, gamma, beta, mean, var, eps=1e-5):
    """Fold Conv1x1 + BatchNorm2d (eval) into (Cout, Cin) weight / (Cout,) bias."""
    s = gamma / jnp.sqrt(var + eps)
    return w_conv * s[:, None], (b_conv - mean) * s + beta


def _reference_pam_block(x, wq, bq, wk, bk, wv, bv, exp_bf16):
    """Plain-JAX _PAMBlock forward using the module's own flatten ordering
    (stack of the two width halves), mirroring the kernel's bf16-operand /
    f32-accumulate matmul and exp policy."""
    n, _, h, w_full = x.shape
    w_half = w_full // 2
    c_k, c_v = wq.shape[0], wv.shape[0]
    s = c_k ** -0.5
    bf = lambda a: a.astype(jnp.bfloat16).astype(jnp.float32)

    xb = bf(x)

    def conv1x1(wt, bt):
        return jnp.einsum("oc,nchw->nohw", bf(wt), xb) + bt[None, :, None, None]

    q = conv1x1(wq * s, bq * s)
    k = conv1x1(wk, bk)
    v = conv1x1(wv, bv)

    def flat(t):   # torch: stack([t[..., :w], t[..., w:]], 4).view(n, c, -1)
        return jnp.stack([t[..., :w_half], t[..., w_half:]], axis=4).reshape(
            n, t.shape[1], -1)

    qf, kf, vf = flat(q), flat(k), flat(v)                       # (n, C, L)
    sim = jnp.einsum("nci,ncj->nij", bf(qf), bf(kf))             # (n, L, L)
    z = sim - jnp.max(sim, axis=-1, keepdims=True)
    if exp_bf16:
        p = jnp.exp(z.astype(jnp.bfloat16)).astype(jnp.float32)
    else:
        p = jnp.exp(z)
    p = bf(p)
    ctx = jnp.einsum("ncj,nij->nci", bf(vf), p)                  # (n, Cv, L)
    ctx = ctx / jnp.sum(p, axis=-1)[:, None, :]
    ctx = ctx.reshape(n, c_v, h, w_half, 2)
    return jnp.concatenate([ctx[..., 0], ctx[..., 1]], axis=3)   # (n, Cv, h, 2w)


if __name__ == "__main__":
    N, C_in, H, W_full = 2, 32, 8, 16            # W_full = 2*w with w = 8
    key_channels, value_channels = 4, 32

    root = jax.random.PRNGKey(0)
    ks = jax.random.split(root, 16)
    x = jax.random.normal(ks[0], (N, C_in, H, W_full), jnp.float32)

    wq_conv = 0.1 * jax.random.normal(ks[1], (key_channels, C_in), jnp.float32)
    bq_conv = 0.1 * jax.random.normal(ks[2], (key_channels,), jnp.float32)
    wk_conv = 0.1 * jax.random.normal(ks[3], (key_channels, C_in), jnp.float32)
    bk_conv = 0.1 * jax.random.normal(ks[4], (key_channels,), jnp.float32)
    wv = 0.1 * jax.random.normal(ks[5], (value_channels, C_in), jnp.float32)
    bv = 0.1 * jax.random.normal(ks[6], (value_channels,), jnp.float32)

    # BatchNorm2d (inference) parameters for f_query / f_key.
    gq = 1.0 + 0.1 * jax.random.normal(ks[7], (key_channels,), jnp.float32)
    betaq = 0.05 * jax.random.normal(ks[8], (key_channels,), jnp.float32)
    mq = 0.05 * jax.random.normal(ks[9], (key_channels,), jnp.float32)
    vq = 1.0 + 0.1 * jax.random.uniform(ks[10], (key_channels,), jnp.float32)
    gk = 1.0 + 0.1 * jax.random.normal(ks[11], (key_channels,), jnp.float32)
    betak = 0.05 * jax.random.normal(ks[12], (key_channels,), jnp.float32)
    mk = 0.05 * jax.random.normal(ks[13], (key_channels,), jnp.float32)
    vk = 1.0 + 0.1 * jax.random.uniform(ks[14], (key_channels,), jnp.float32)

    wq, bq = _fold_conv_bn(wq_conv, bq_conv, gq, betaq, mq, vq)
    wk, bk = _fold_conv_bn(wk_conv, bk_conv, gk, betak, mk, vk)

    out = pam_block_forward(x, wq, bq, wk, bk, wv, bv)
    out = jax.block_until_ready(out)

    ref = _reference_pam_block(x, wq, bq, wk, bk, wv, bv, _exp_in_bf16())

    assert out.shape == (N, value_channels, H, W_full), out.shape
    max_err = float(jnp.max(jnp.abs(out - ref)))
    assert jnp.allclose(out, ref, rtol=1e-2, atol=1e-2), max_err
    print("KERNEL_OK")
</pallas_src>

<mosaic_0001>
module attributes {stable_mosaic.version = 11 : i64} {
  func.func @_pam_kernel_fused(%arg0: i32, %arg1: i32, %arg2: memref<2x32x128xf32, #tpu.memory_space<vmem>>, %arg3: memref<56x32xbf16, #tpu.memory_space<vmem>>, %arg4: memref<56x1xf32, #tpu.memory_space<vmem>>, %arg5: memref<2x32x128xf32, #tpu.memory_space<vmem>>) attributes {dimension_semantics = [#tpu.dimension_semantics<parallel>, #tpu.dimension_semantics<parallel>], iteration_bounds = array<i64: 1, 1>, scalar_prefetch = 0 : i64, scratch_operands = 0 : i64, tpu.core_type = #tpu.core_type<tc>, window_params = [{transform_indices = @transform_0, window_bounds = array<i64: 2, 32, 128>}, {pipeline_mode = #tpu.pipeline_mode<synchronous>, transform_indices = @transform_1, window_bounds = array<i64: 56, 32>}, {pipeline_mode = #tpu.pipeline_mode<synchronous>, transform_indices = @transform_2, window_bounds = array<i64: 56, 1>}, {transform_indices = @transform_3, window_bounds = array<i64: 2, 32, 128>}]} {
    %c0 = arith.constant 0 : index
    %c0_0 = arith.constant 0 : index
    %0 = vector.load %arg3[%c0, %c0_0] : memref<56x32xbf16, #tpu.memory_space<vmem>>, vector<56x32xbf16>
    %c0_1 = arith.constant 0 : index
    %c0_2 = arith.constant 0 : index
    %1 = vector.load %arg4[%c0_1, %c0_2] : memref<56x1xf32, #tpu.memory_space<vmem>>, vector<56x1xf32>
    %c0_3 = arith.constant 0 : index
    %c0_4 = arith.constant 0 : index
    %c0_5 = arith.constant 0 : index
    %2 = vector.load %arg2[%c0_3, %c0_4, %c0_5] : memref<2x32x128xf32, #tpu.memory_space<vmem>>, vector<1x32x128xf32>
    %3 = vector.shape_cast %2 : vector<1x32x128xf32> to vector<32x128xf32>
    %4 = arith.truncf %3 : vector<32x128xf32> to vector<32x128xbf16>
    %cst = arith.constant dense<0.000000e+00> : vector<56x128xf32>
    %5 = tpu.matmul %0, %4, %cst {dimension_numbers = #tpu.dot_dimension_numbers<[1], [0], [0], [1], [0, 0, 1, 1], [], []>} : vector<56x32xbf16>, vector<32x128xbf16>, vector<56x128xf32> -> vector<56x128xf32>
    %6 = vector.broadcast %1 : vector<56x1xf32> to vector<56x128xf32>
    %7 = arith.addf %5, %6 : vector<56x128xf32>
    %8 = vector.extract_strided_slice %7 {offsets = [0, 0], sizes = [8, 128], strides = [1, 1]} : vector<56x128xf32> to vector<8x128xf32>
    %9 = vector.extract_strided_slice %7 {offsets = [8, 0], sizes = [8, 128], strides = [1, 1]} : vector<56x128xf32> to vector<8x128xf32>
    %10 = arith.truncf %9 : vector<8x128xf32> to vector<8x128xbf16>
    %11 = vector.extract_strided_slice %7 {offsets = [16, 0], sizes = [40, 128], strides = [1, 1]} : vector<56x128xf32> to vector<40x128xf32>
    %12 = arith.truncf %11 : vector<40x128xf32> to vector<40x128xbf16>
    %13 = arith.truncf %8 : vector<8x128xf32> to vector<8x128xbf16>
    %cst_6 = arith.constant dense<0.000000e+00> : vector<128x128xf32>
    %14 = tpu.matmul %13, %10, %cst_6 {dimension_numbers = #tpu.dot_dimension_numbers<[0], [0], [1], [1], [0, 1, 1, 1], [], []>} : vector<8x128xbf16>, vector<8x128xbf16>, vector<128x128xf32> -> vector<128x128xf32>
    %cst_7 = arith.constant dense<0xFF800000> : vector<128xf32>
    %15 = vector.multi_reduction <maximumf>, %14, %cst_7 [1] : vector<128x128xf32> to vector<128xf32>
    %16 = vector.shape_cast %15 : vector<128xf32> to vector<128x1xf32>
    %17 = vector.broadcast %16 : vector<128x1xf32> to vector<128x128xf32>
    %18 = arith.subf %14, %17 : vector<128x128xf32>
    %19 = math.exp %18 : vector<128x128xf32>
    %20 = arith.truncf %19 : vector<128x128xf32> to vector<128x128xbf16>
    %cst_8 = arith.constant dense<0.000000e+00> : vector<40x128xf32>
    %21 = tpu.matmul %12, %20, %cst_8 {dimension_numbers = #tpu.dot_dimension_numbers<[1], [1], [0], [0], [0, 0, 1, 0], [], []>} : vector<40x128xbf16>, vector<128x128xbf16>, vector<40x128xf32> -> vector<40x128xf32>
    %22 = vector.extract_strided_slice %21 {offsets = [32, 0], sizes = [1, 128], strides = [1, 1]} : vector<40x128xf32> to vector<1x128xf32>
    %23 = tpu.reciprocal %22 {approx = true} : vector<1x128xf32> -> vector<1x128xf32>
    %24 = vector.extract_strided_slice %21 {offsets = [0, 0], sizes = [32, 128], strides = [1, 1]} : vector<40x128xf32> to vector<32x128xf32>
    %25 = vector.broadcast %23 : vector<1x128xf32> to vector<32x128xf32>
    %26 = arith.mulf %24, %25 : vector<32x128xf32>
    %c0_9 = arith.constant 0 : index
    %c0_10 = arith.constant 0 : index
    %c0_11 = arith.constant 0 : index
    %27 = vector.load %arg5[%c0_9, %c0_10, %c0_11] : memref<2x32x128xf32, #tpu.memory_space<vmem>>, vector<1x32x128xf32>
    %28 = vector.shape_cast %27 : vector<1x32x128xf32> to vector<32x128xf32>
    %29 = vector.shape_cast %26 : vector<32x128xf32> to vector<1x32x128xf32>
    tpu.vector_store %arg5[%c0_9, %c0_10, %c0_11], %29 {strides = array<i32>} : memref<2x32x128xf32, #tpu.memory_space<vmem>>, vector<1x32x128xf32>,
    %c1 = arith.constant 1 : index
    %c0_12 = arith.constant 0 : index
    %c0_13 = arith.constant 0 : index
    %30 = vector.load %arg2[%c1, %c0_12, %c0_13] : memref<2x32x128xf32, #tpu.memory_space<vmem>>, vector<1x32x128xf32>
    %31 = vector.shape_cast %30 : vector<1x32x128xf32> to vector<32x128xf32>
    %32 = arith.truncf %31 : vector<32x128xf32> to vector<32x128xbf16>
    %cst_14 = arith.constant dense<0.000000e+00> : vector<56x128xf32>
    %33 = tpu.matmul %0, %32, %cst_14 {dimension_numbers = #tpu.dot_dimension_numbers<[1], [0], [0], [1], [0, 0, 1, 1], [], []>} : vector<56x32xbf16>, vector<32x128xbf16>, vector<56x128xf32> -> vector<56x128xf32>
    %34 = vector.broadcast %1 : vector<56x1xf32> to vector<56x128xf32>
    %35 = arith.addf %33, %34 : vector<56x128xf32>
    %36 = vector.extract_strided_slice %35 {offsets = [0, 0], sizes = [8, 128], strides = [1, 1]} : vector<56x128xf32> to vector<8x128xf32>
    %37 = vector.extract_strided_slice %35 {offsets = [8, 0], sizes = [8, 128], strides = [1, 1]} : vector<56x128xf32> to vector<8x128xf32>
    %38 = arith.truncf %37 : vector<8x128xf32> to vector<8x128xbf16>
    %39 = vector.extract_strided_slice %35 {offsets = [16, 0], sizes = [40, 128], strides = [1, 1]} : vector<56x128xf32> to vector<40x128xf32>
    %40 = arith.truncf %39 : vector<40x128xf32> to vector<40x128xbf16>
    %41 = arith.truncf %36 : vector<8x128xf32> to vector<8x128xbf16>
    %cst_15 = arith.constant dense<0.000000e+00> : vector<128x128xf32>
    %42 = tpu.matmul %41, %38, %cst_15 {dimension_numbers = #tpu.dot_dimension_numbers<[0], [0], [1], [1], [0, 1, 1, 1], [], []>} : vector<8x128xbf16>, vector<8x128xbf16>, vector<128x128xf32> -> vector<128x128xf32>
    %cst_16 = arith.constant dense<0xFF800000> : vector<128xf32>
    %43 = vector.multi_reduction <maximumf>, %42, %cst_16 [1] : vector<128x128xf32> to vector<128xf32>
    %44 = vector.shape_cast %43 : vector<128xf32> to vector<128x1xf32>
    %45 = vector.broadcast %44 : vector<128x1xf32> to vector<128x128xf32>
    %46 = arith.subf %42, %45 : vector<128x128xf32>
    %47 = math.exp %46 : vector<128x128xf32>
    %48 = arith.truncf %47 : vector<128x128xf32> to vector<128x128xbf16>
    %cst_17 = arith.constant dense<0.000000e+00> : vector<40x128xf32>
    %49 = tpu.matmul %40, %48, %cst_17 {dimension_numbers = #tpu.dot_dimension_numbers<[1], [1], [0], [0], [0, 0, 1, 0], [], []>} : vector<40x128xbf16>, vector<128x128xbf16>, vector<40x128xf32> -> vector<40x128xf32>
    %50 = vector.extract_strided_slice %49 {offsets = [32, 0], sizes = [1, 128], strides = [1, 1]} : vector<40x128xf32> to vector<1x128xf32>
    %51 = tpu.reciprocal %50 {approx = true} : vector<1x128xf32> -> vector<1x128xf32>
    %52 = vector.extract_strided_slice %49 {offsets = [0, 0], sizes = [32, 128], strides = [1, 1]} : vector<40x128xf32> to vector<32x128xf32>
    %53 = vector.broadcast %51 : vector<1x128xf32> to vector<32x128xf32>
    %54 = arith.mulf %52, %53 : vector<32x128xf32>
    %c1_18 = arith.constant 1 : index
    %c0_19 = arith.constant 0 : index
    %c0_20 = arith.constant 0 : index
    %55 = vector.load %arg5[%c1_18, %c0_19, %c0_20] : memref<2x32x128xf32, #tpu.memory_space<vmem>>, vector<1x32x128xf32>
    %56 = vector.shape_cast %55 : vector<1x32x128xf32> to vector<32x128xf32>
    %57 = vector.shape_cast %54 : vector<32x128xf32> to vector<1x32x128xf32>
    tpu.vector_store %arg5[%c1_18, %c0_19, %c0_20], %57 {strides = array<i32>} : memref<2x32x128xf32, #tpu.memory_space<vmem>>, vector<1x32x128xf32>,
    return
  }
  func.func @transform_0(%arg0: i32, %arg1: i32) -> (i32, i32, i32) {
    %c0_i32 = arith.constant 0 : i32
    %c0_i32_0 = arith.constant 0 : i32
    %c0_i32_1 = arith.constant 0 : i32
    return %arg0, %c0_i32, %c0_i32_0 : i32, i32, i32
  }
  func.func @transform_1(%arg0: i32, %arg1: i32) -> (i32, i32) {
    %c0_i32 = arith.constant 0 : i32
    %c0_i32_0 = arith.constant 0 : i32
    %c0_i32_1 = arith.constant 0 : i32
    return %c0_i32, %c0_i32_0 : i32, i32
  }
  func.func @transform_2(%arg0: i32, %arg1: i32) -> (i32, i32) {
    %c0_i32 = arith.constant 0 : i32
    %c0_i32_0 = arith.constant 0 : i32
    %c0_i32_1 = arith.constant 0 : i32
    return %c0_i32, %c0_i32_0 : i32, i32
  }
  func.func @transform_3(%arg0: i32, %arg1: i32) -> (i32, i32, i32) {
    %c0_i32 = arith.constant 0 : i32
    %c0_i32_0 = arith.constant 0 : i32
    return %arg0, %c0_i32, %arg1 : i32, i32, i32
  }
}

</mosaic_0001>

<llo_original>
// kernel: tpu_custom_call.1
$region0: #{tpu_custom_call.1}
  #allocation0 [shape = 'u32[]', space=smem, size = 0x4, offset = 0x4, fixed_abs, tag = 'smem constant byte address 0x4 - core index']
  #allocation1 [shape = 'u32[144,128]{1,0:T(1,128)}', space=vmem, size = 0x12000, scoped, tag = 'internal scratch']
  %s0 = inlined_call_operand.vmem [shape: f32[2,32,128], index: 0, kind: input, shape index: {}]
  %s1 = inlined_call_operand.vmem [shape: bf16[56,32], index: 1, kind: input, shape index: {}]
  %s2 = inlined_call_operand.vmem [shape: f32[56,1], index: 2, kind: input, shape index: {}]
  %s3 = inlined_call_operand.hbm [shape: f32[2,32,128], index: 3, kind: output, shape index: {}]
  %s4 = sld [smem:[#allocation0]]
  $region22: #{tpu_custom_call.1} parent=0
    _
  %s6 = ssub.s32 1, %s4
  %s7 = scalar_select 0, %s6, %s4
  $region1: #{tpu_custom_call.1} parent=0
    #allocation2 [shape = 'u8[32768]{0}', space=vmem, size = 0x8000, scoped, tag = 'output window, operand 0, single buffered']
    #allocation3 [shape = 's32[1]{0}', space=sflag, size = 0x4, scoped, tag = 'scoped memory for tpu_custom_call.1']
    %8 = vsyncpa [#allocation3], 0
    // Predicated region
    $region2: #{tpu_custom_call.1} parent=1 // pred_check
      _
    $region3: #{tpu_custom_call.1} parent=1 // pred_check_branch
      %10 = sbr.rel (0) target = $region5
    $region4: #{tpu_custom_call.1} parent=1 // pred_region
      _
    $region5: #{tpu_custom_call.1} parent=1 // pred_fallthru
      _
    // Predicated region
    $region6: #{tpu_custom_call.1} parent=1 // pred_check
      _
    $region7: #{tpu_custom_call.1} parent=1 // pred_check_branch
      %12 = sbr.rel (0) target = $region9
    $region8: #{tpu_custom_call.1} parent=1 // pred_region
      _
    $region9: #{tpu_custom_call.1} parent=1 // pred_fallthru
      _
    // Predicated region
    $region10: #{tpu_custom_call.1} parent=1 // pred_check
      _
    $region11: #{tpu_custom_call.1} parent=1 // pred_check_branch
      %14 = sbr.rel (0) target = $region13
    $region12: #{tpu_custom_call.1} parent=1 // pred_region
      _
    $region13: #{tpu_custom_call.1} parent=1 // pred_fallthru
      _
    %v16 = vld [vmem:[%s1] sm:$0xf]
    %v17 = vld [vmem:[%s1 + $0x4] sm:$0xf]
    %v18 = vld [vmem:[%s1 + $0x8] sm:$0xf]
    %v19 = vld [vmem:[%s1 + $0xc] sm:$0xf]
    %v20 = vld [vmem:[%s1 + $0x10] sm:$0xf]
    %v21 = vld [vmem:[%s1 + $0x14] sm:$0xf]
    %v22 = vld [vmem:[%s1 + $0x18] sm:$0xf]
    %v23 = vld [vmem:[%s2] sm:$0xff]
    %v24 = vld [vmem:[%s2 + $0x8] sm:$0xff]
    %v25 = vld [vmem:[%s2 + $0x10] sm:$0xff]
    %v26 = vld [vmem:[%s2 + $0x18] sm:$0xff]
    %v27 = vld [vmem:[%s2 + $0x20] sm:$0xff]
    %v28 = vld [vmem:[%s2 + $0x28] sm:$0xff]
    %v29 = vld [vmem:[%s2 + $0x30] sm:$0xff]
    %v30 = vld [vmem:[%s0] sm:$0xff]
    %v31 = vld [vmem:[%s0 + $0x8] sm:$0xff]
    %v32 = vld [vmem:[%s0 + $0x10] sm:$0xff]
    %v33 = vld [vmem:[%s0 + $0x18] sm:$0xff]
    %v34 = vpack.c.bf16 %v31, %v30
    %v35 = vpack.c.bf16 %v33, %v32
    %37 = vset.pattern.permute.xlu0 0
    %38 = vperm.xlu0 %37, %v23
    %v39 = vpop.permute.xlu0 %38
    %42 = vset.pattern.permute.xlu0 0
    %43 = vperm.xlu0 %42, %v24
    %v44 = vpop.permute.xlu0 %43
    %47 = vset.pattern.permute.xlu0 0
    %48 = vperm.xlu0 %47, %v25
    %v49 = vpop.permute.xlu0 %48
    %52 = vset.pattern.permute.xlu0 0
    %53 = vperm.xlu0 %52, %v26
    %v54 = vpop.permute.xlu0 %53
    %57 = vset.pattern.permute.xlu0 0
    %58 = vperm.xlu0 %57, %v27
    %v59 = vpop.permute.xlu0 %58
    %62 = vset.pattern.permute.xlu0 0
    %63 = vperm.xlu0 %62, %v28
    %v64 = vpop.permute.xlu0 %63
    %67 = vset.pattern.permute.xlu0 0
    %68 = vperm.xlu0 %67, %v29
    %v69 = vpop.permute.xlu0 %68
    %v78 = vunpack.c.l.b16 %v16
    %v79 = vunpack.c.l.b16 %v17
    %v80 = vunpack.c.l.b16 %v18
    %v81 = vunpack.c.l.b16 %v19
    %v82 = vunpack.c.l.b16 %v20
    %v83 = vunpack.c.l.b16 %v21
    %v84 = vunpack.c.l.b16 %v22
    %v85 = vpack.c.b16 %v79, %v78
    %v86 = vpack.c.b16 %v81, %v80
    %v87 = vpack.c.b16 %v83, %v82
    %v88 = vpack.c.b16 %v84, %v84
    %vm89 = vcmask 261120
    %v91 = vsel %vm89, %v85, 0
    %v94 = vsel %vm89, %v86, 0
    %v97 = vsel %vm89, %v87, 0
    %v100 = vsel %vm89, %v88, 0
    %102 = vmatprep.subr.bf16.mxu0 0
    %103 = vmatpush1.bf16.msra.mxu0 0
    %104 = vmatprep.subr.bf16.mxu0 0
    %105 = vmatpush1.bf16.msra.mxu0 0
    %106 = vmatprep.subr.bf16.mxu0 0
    %107 = vmatpush1.bf16.msra.mxu0 0
    %108 = vmatprep.subr.bf16.mxu0 0
    %109 = vmatpush1.bf16.msra.mxu0 0
    %110 = vmatprep.subr.bf16.mxu0 0
    %111 = vmatpush1.bf16.msra.mxu0 0
    %112 = vmatprep.subr.bf16.mxu0 0
    %113 = vmatpush1.bf16.msra.mxu0 0
    %114 = vmatprep.subr.bf16.mxu0 0
    %115 = vmatpush1.bf16.msra.mxu0 %v35
    %116 = vmatprep.subr.bf16.mxu0 0
    %117 = vmatpush1.bf16.msra.mxu0 %v34
    %118 = vmatprep.subr.bf16.mxu0 0
    %119 = vmatpush2.bf16.msra.mxu0 0
    %120 = vmatprep.subr.bf16.mxu0 0
    %121 = vmatpush2.bf16.msra.mxu0 0
    %122 = vmatprep.subr.bf16.mxu0 0
    %123 = vmatpush2.bf16.msra.mxu0 0
    %124 = vmatprep.subr.bf16.mxu0 0
    %125 = vmatpush2.bf16.msra.mxu0 0
    %126 = vmatprep.subr.bf16.mxu0 0
    %127 = vmatpush2.bf16.msra.mxu0 0
    %128 = vmatprep.subr.bf16.mxu0 0
    %129 = vmatpush2.bf16.msra.mxu0 0
    %130 = vmatprep.subr.bf16.mxu0 0
    %131 = vmatpush2.bf16.msra.mxu0 0
    %132 = vmatprep.subr.bf16.mxu0 0
    %133 = vmatpush2.bf16.msra.mxu0 0
    %134 = vmatprep.mubr.bf16.mxu0 0
    %135 = vmatmul.mubr.bf16.gmra.mxu0 %v91
    %v136 = vpop.f32.mrf.mxu0
    %v137 = vadd.f32 %v39, %v136
    %v138 = vpop.f32.mrf.mxu0
    %v139 = vpop.f32.mrf.mxu0
    %v140 = vadd.f32 %v44, %v139
    %v141 = vpop.f32.mrf.mxu0
    %142 = vmatprep.mubr.bf16.mxu0 0
    %143 = vmatmul.mubr.bf16.gmra.mxu0 %v94
    %v144 = vpop.f32.mrf.mxu0
    %v145 = vadd.f32 %v49, %v144
    %v146 = vpop.f32.mrf.mxu0
    %v147 = vpop.f32.mrf.mxu0
    %v148 = vadd.f32 %v54, %v147
    %v149 = vpop.f32.mrf.mxu0
    %150 = vmatprep.mubr.bf16.mxu0 0
    %151 = vmatmul.mubr.bf16.gmra.mxu0 %v97
    %v152 = vpop.f32.mrf.mxu0
    %v153 = vadd.f32 %v59, %v152
    %v154 = vpop.f32.mrf.mxu0
    %v155 = vpop.f32.mrf.mxu0
    %v156 = vadd.f32 %v64, %v155
    %v157 = vpop.f32.mrf.mxu0
    %158 = vmatprep.mubr.bf16.mxu0 0
    %159 = vmatmul.mubr.bf16.gmra.mxu0 %v100
    %v160 = vpop.f32.mrf.mxu0
    %v161 = vadd.f32 %v69, %v160
    %v162 = vpop.f32.mrf.mxu0
    %v163 = vpop.f32.mrf.mxu0
    %v164 = vpop.f32.mrf.mxu0
    %165 = vdwg.mxu0
    %v166 = vpack.c.bf16 %v140, %v140
    %v167 = vpack.c.bf16 %v148, %v145
    %v168 = vpack.c.bf16 %v156, %v153
    %v169 = vpack.c.bf16 %v161, %v161
    %v170 = vpack.c.bf16 %v137, %v137
    %171 = vxpose.xlu0.c.b16.start [1/8] %v170, 128
    %172 = vxpose.xlu0.c.b16.cont [2/8] 0, 128
    %173 = vxpose.xlu0.c.b16.cont [3/8] 0, 128
    %174 = vxpose.xlu0.c.b16.cont [4/8] 0, 128
    %175 = vxpose.xlu0.c.b16.cont [5/8] 0, 128
    %176 = vxpose.xlu0.c.b16.cont [6/8] 0, 128
    %177 = vxpose.xlu0.c.b16.cont [7/8] 0, 128
    %178 = vxpose.xlu0.c.b16.end [8/8] 0, 128
    %v179 = vpop.trf.xlu0
    %v180 = vpop.trf.xlu0
    %v181 = vpop.trf.xlu0
    %v182 = vpop.trf.xlu0
    %v183 = vpop.trf.xlu0
    %v184 = vpop.trf.xlu0
    %v185 = vpop.trf.xlu0
    %v186 = vpop.trf.xlu0
    %vm187 = vcmask 64512
    %v189 = vsel %vm187, %v179, 0
    %v192 = vsel %vm187, %v180, 0
    %v195 = vsel %vm187, %v181, 0
    %v198 = vsel %vm187, %v182, 0
    %v201 = vsel %vm187, %v183, 0
    %v204 = vsel %vm187, %v184, 0
    %v207 = vsel %vm187, %v185, 0
    %v210 = vsel %vm187, %v186, 0
    %vm212 = vcmask 1043456
    %v214 = vsel %vm212, %v166, 0
    %216 = vmatprep.subr.bf16.mxu0 0
    %217 = vmatpush1.bf16.msra.mxu0 0
    %218 = vmatprep.subr.bf16.mxu0 0
    %219 = vmatpush1.bf16.msra.mxu0 0
    %220 = vmatprep.subr.bf16.mxu0 0
    %221 = vmatpush1.bf16.msra.mxu0 0
    %222 = vmatprep.subr.bf16.mxu0 0
    %223 = vmatpush1.bf16.msra.mxu0 0
    %224 = vmatprep.subr.bf16.mxu0 0
    %225 = vmatpush1.bf16.msra.mxu0 0
    %226 = vmatprep.subr.bf16.mxu0 0
    %227 = vmatpush1.bf16.msra.mxu0 0
    %228 = vmatprep.subr.bf16.mxu0 0
    %229 = vmatpush1.bf16.msra.mxu0 0
    %230 = vmatprep.subr.bf16.mxu0 0
    %231 = vmatpush1.bf16.msra.mxu0 %v214
    %232 = vmatprep.subr.bf16.mxu0 0
    %233 = vmatpush2.bf16.msra.mxu0 0
    %234 = vmatprep.subr.bf16.mxu0 0
    %235 = vmatpush2.bf16.msra.mxu0 0
    %236 = vmatprep.subr.bf16.mxu0 0
    %237 = vmatpush2.bf16.msra.mxu0 0
    %238 = vmatprep.subr.bf16.mxu0 0
    %239 = vmatpush2.bf16.msra.mxu0 0
    %240 = vmatprep.subr.bf16.mxu0 0
    %241 = vmatpush2.bf16.msra.mxu0 0
    %242 = vmatprep.subr.bf16.mxu0 0
    %243 = vmatpush2.bf16.msra.mxu0 0
    %244 = vmatprep.subr.bf16.mxu0 0
    %245 = vmatpush2.bf16.msra.mxu0 0
    %246 = vmatprep.subr.bf16.mxu0 0
    %247 = vmatpush2.bf16.msra.mxu0 0
    %248 = vmatprep.mubr.bf16.mxu0 0
    %249 = vmatmul.mubr.bf16.gmra.mxu0 %v189
    %v250 = vpop.f32.mrf.mxu0
    %v251 = vadd.f32 0.0, %v250
    %v252 = vpop.f32.mrf.mxu0
    %v253 = vpop.f32.mrf.mxu0
    %v254 = vadd.f32 0.0, %v253
    %v255 = vpop.f32.mrf.mxu0
    %256 = vmatprep.mubr.bf16.mxu0 0
    %257 = vmatmul.mubr.bf16.gmra.mxu0 %v192
    %v258 = vpop.f32.mrf.mxu0
    %v259 = vadd.f32 0.0, %v258
    %v260 = vpop.f32.mrf.mxu0
    %v261 = vpop.f32.mrf.mxu0
    %v262 = vadd.f32 0.0, %v261
    %v263 = vpop.f32.mrf.mxu0
    %264 = vmatprep.mubr.bf16.mxu0 0
    %265 = vmatmul.mubr.bf16.gmra.mxu0 %v195
    %v266 = vpop.f32.mrf.mxu0
    %v267 = vadd.f32 0.0, %v266
    %v268 = vpop.f32.mrf.mxu0
    %v269 = vpop.f32.mrf.mxu0
    %v270 = vadd.f32 0.0, %v269
    %v271 = vpop.f32.mrf.mxu0
    %272 = vmatprep.mubr.bf16.mxu0 0
    %273 = vmatmul.mubr.bf16.gmra.mxu0 %v198
    %v274 = vpop.f32.mrf.mxu0
    %v275 = vadd.f32 0.0, %v274
    %v276 = vpop.f32.mrf.mxu0
    %v277 = vpop.f32.mrf.mxu0
    %v278 = vadd.f32 0.0, %v277
    %v279 = vpop.f32.mrf.mxu0
    %280 = vmatprep.mubr.bf16.mxu0 0
    %281 = vmatmul.mubr.bf16.gmra.mxu0 %v201
    %v282 = vpop.f32.mrf.mxu0
    %v283 = vadd.f32 0.0, %v282
    %v284 = vpop.f32.mrf.mxu0
    %v285 = vpop.f32.mrf.mxu0
    %v286 = vadd.f32 0.0, %v285
    %v287 = vpop.f32.mrf.mxu0
    %288 = vmatprep.mubr.bf16.mxu0 0
    %289 = vmatmul.mubr.bf16.gmra.mxu0 %v204
    %v290 = vpop.f32.mrf.mxu0
    %v291 = vadd.f32 0.0, %v290
    %v292 = vpop.f32.mrf.mxu0
    %v293 = vpop.f32.mrf.mxu0
    %v294 = vadd.f32 0.0, %v293
    %v295 = vpop.f32.mrf.mxu0
    %296 = vmatprep.mubr.bf16.mxu0 0
    %297 = vmatmul.mubr.bf16.gmra.mxu0 %v207
    %v298 = vpop.f32.mrf.mxu0
    %v299 = vadd.f32 0.0, %v298
    %v300 = vpop.f32.mrf.mxu0
    %v301 = vpop.f32.mrf.mxu0
    %v302 = vadd.f32 0.0, %v301
    %v303 = vpop.f32.mrf.mxu0
    %304 = vmatprep.mubr.bf16.mxu0 0
    %305 = vmatmul.mubr.bf16.gmra.mxu0 %v210
    %v306 = vpop.f32.mrf.mxu0
    %v307 = vadd.f32 0.0, %v306
    %v308 = vpop.f32.mrf.mxu0
    %v309 = vpop.f32.mrf.mxu0
    %v310 = vadd.f32 0.0, %v309
    %v311 = vpop.f32.mrf.mxu0
    %312 = vdwg.mxu0
    %313 = vmax.xlane.f32.xlu0 %v251
    %v314 = vpop.xlane.xlu0 %313
    %315 = vmax.xlane.f32.xlu0 %v254
    %v316 = vpop.xlane.xlu0 %315
    %317 = vmax.xlane.f32.xlu0 %v259
    %v318 = vpop.xlane.xlu0 %317
    %319 = vmax.xlane.f32.xlu0 %v262
    %v320 = vpop.xlane.xlu0 %319
    %321 = vmax.xlane.f32.xlu0 %v267
    %v322 = vpop.xlane.xlu0 %321
    %323 = vmax.xlane.f32.xlu0 %v270
    %v324 = vpop.xlane.xlu0 %323
    %325 = vmax.xlane.f32.xlu0 %v275
    %v326 = vpop.xlane.xlu0 %325
    %327 = vmax.xlane.f32.xlu0 %v278
    %v328 = vpop.xlane.xlu0 %327
    %329 = vmax.xlane.f32.xlu0 %v283
    %v330 = vpop.xlane.xlu0 %329
    %331 = vmax.xlane.f32.xlu0 %v286
    %v332 = vpop.xlane.xlu0 %331
    %333 = vmax.xlane.f32.xlu0 %v291
    %v334 = vpop.xlane.xlu0 %333
    %335 = vmax.xlane.f32.xlu0 %v294
    %v336 = vpop.xlane.xlu0 %335
    %337 = vmax.xlane.f32.xlu0 %v299
    %v338 = vpop.xlane.xlu0 %337
    %339 = vmax.xlane.f32.xlu0 %v302
    %v340 = vpop.xlane.xlu0 %339
    %341 = vmax.xlane.f32.xlu0 %v307
    %v342 = vpop.xlane.xlu0 %341
    %343 = vmax.xlane.f32.xlu0 %v310
    %v344 = vpop.xlane.xlu0 %343
    %v345 = vsub.f32 %v251, %v314
    %v346 = vsub.f32 %v254, %v316
    %v347 = vsub.f32 %v259, %v318
    %v348 = vsub.f32 %v262, %v320
    %v349 = vsub.f32 %v267, %v322
    %v350 = vsub.f32 %v270, %v324
    %v351 = vsub.f32 %v275, %v326
    %v352 = vsub.f32 %v278, %v328
    %v353 = vsub.f32 %v283, %v330
    %v354 = vsub.f32 %v286, %v332
    %v355 = vsub.f32 %v291, %v334
    %v356 = vsub.f32 %v294, %v336
    %v357 = vsub.f32 %v299, %v338
    %v358 = vsub.f32 %v302, %v340
    %v359 = vsub.f32 %v307, %v342
    %v360 = vsub.f32 %v310, %v344
    %v361 = vmul.f32 %v345, 1.442695
    %v362 = vpow.pop %v361
    %v363 = vmul.f32 %v346, 1.442695
    %v364 = vpow.pop %v363
    %v365 = vmul.f32 %v347, 1.442695
    %v366 = vpow.pop %v365
    %v367 = vmul.f32 %v348, 1.442695
    %v368 = vpow.pop %v367
    %v369 = vmul.f32 %v349, 1.442695
    %v370 = vpow.pop %v369
    %v371 = vmul.f32 %v350, 1.442695
    %v372 = vpow.pop %v371
    %v373 = vmul.f32 %v351, 1.442695
    %v374 = vpow.pop %v373
    %v375 = vmul.f32 %v352, 1.442695
    %v376 = vpow.pop %v375
    %v377 = vmul.f32 %v353, 1.442695
    %v378 = vpow.pop %v377
    %v379 = vmul.f32 %v354, 1.442695
    %v380 = vpow.pop %v379
    %v381 = vmul.f32 %v355, 1.442695
    %v382 = vpow.pop %v381
    %v383 = vmul.f32 %v356, 1.442695
    %v384 = vpow.pop %v383
    %v385 = vmul.f32 %v357, 1.442695
    %v386 = vpow.pop %v385
    %v387 = vmul.f32 %v358, 1.442695
    %v388 = vpow.pop %v387
    %v389 = vmul.f32 %v359, 1.442695
    %v390 = vpow.pop %v389
    %v391 = vmul.f32 %v360, 1.442695
    %v392 = vpow.pop %v391
    %v393 = vpack.c.bf16 %v364, %v362
    %v394 = vpack.c.bf16 %v368, %v366
    %v395 = vpack.c.bf16 %v372, %v370
    %v396 = vpack.c.bf16 %v376, %v374
    %v397 = vpack.c.bf16 %v380, %v378
    %v398 = vpack.c.bf16 %v384, %v382
    %v399 = vpack.c.bf16 %v388, %v386
    %v400 = vpack.c.bf16 %v392, %v390
    %401 = vmatprep.subr.bf16.mxu0 0
    %402 = vmatpush1.bf16.xpose.msra.mxu0 %v400
    %403 = vmatprep.subr.bf16.mxu0 0
    %404 = vmatpush1.bf16.xpose.msra.mxu0 %v399
    %405 = vmatprep.subr.bf16.mxu0 0
    %406 = vmatpush1.bf16.xpose.msra.mxu0 %v398
    %407 = vmatprep.subr.bf16.mxu0 0
    %408 = vmatpush1.bf16.xpose.msra.mxu0 %v397
    %409 = vmatprep.subr.bf16.mxu0 0
    %410 = vmatpush1.bf16.xpose.msra.mxu0 %v396
    %411 = vmatprep.subr.bf16.mxu0 0
    %412 = vmatpush1.bf16.xpose.msra.mxu0 %v395
    %413 = vmatprep.subr.bf16.mxu0 0
    %414 = vmatpush1.bf16.xpose.msra.mxu0 %v394
    %415 = vmatprep.subr.bf16.mxu0 0
    %416 = vmatpush1.bf16.xpose.msra.mxu0 %v393
    %417 = vmatprep.subr.bf16.mxu0 0
    %418 = vmatpush2.bf16.xpose.msra.mxu0 0
    %419 = vmatprep.subr.bf16.mxu0 0
    %420 = vmatpush2.bf16.xpose.msra.mxu0 0
    %421 = vmatprep.subr.bf16.mxu0 0
    %422 = vmatpush2.bf16.xpose.msra.mxu0 0
    %423 = vmatprep.subr.bf16.mxu0 0
    %424 = vmatpush2.bf16.xpose.msra.mxu0 0
    %425 = vmatprep.subr.bf16.mxu0 0
    %426 = vmatpush2.bf16.xpose.msra.mxu0 0
    %427 = vmatprep.subr.bf16.mxu0 0
    %428 = vmatpush2.bf16.xpose.msra.mxu0 0
    %429 = vmatprep.subr.bf16.mxu0 0
    %430 = vmatpush2.bf16.xpose.msra.mxu0 0
    %431 = vmatprep.subr.bf16.mxu0 0
    %432 = vmatpush2.bf16.xpose.msra.mxu0 0
    %433 = vmatprep.mubr.bf16.mxu0 0
    %434 = vmatmul.mubr.bf16.gmra.mxu0 %v167
    %v435 = vpop.f32.mrf.mxu0
    %v436 = vadd.f32 0.0, %v435
    %v437 = vpop.f32.mrf.mxu0
    %v438 = vpop.f32.mrf.mxu0
    %v439 = vadd.f32 0.0, %v438
    %v440 = vpop.f32.mrf.mxu0
    %441 = vmatprep.mubr.bf16.mxu0 0
    %442 = vmatmul.mubr.bf16.gmra.mxu0 %v168
    %v443 = vpop.f32.mrf.mxu0
    %v444 = vadd.f32 0.0, %v443
    %v445 = vpop.f32.mrf.mxu0
    %v446 = vpop.f32.mrf.mxu0
    %v447 = vadd.f32 0.0, %v446
    %v448 = vpop.f32.mrf.mxu0
    %449 = vmatprep.mubr.bf16.mxu0 0
    %450 = vmatmul.mubr.bf16.gmra.mxu0 %v169
    %v451 = vpop.f32.mrf.mxu0
    %v452 = vadd.f32 0.0, %v451
    %v453 = vpop.f32.mrf.mxu0
    %v454 = vpop.f32.mrf.mxu0
    %v455 = vpop.f32.mrf.mxu0
    %456 = vdwg.mxu0
    %v457 = vrcp.pop %v452
    %v458 = vlaneseq
    %v459 = vshrl.u32 %v458, 7
    %v460 = vsub.s32 0, %v459
    %v461 = vrot.slane %v457, %v460
    %v462 = vmul.f32 %v436, %v461
    %v463 = vmul.f32 %v439, %v461
    %v464 = vmul.f32 %v444, %v461
    %v465 = vmul.f32 %v447, %v461
    %466 = vst [vmem:[#allocation2] sm:$0xff] %v462
    %467 = vst [vmem:[#allocation2 + $0x8] sm:$0xff] %v463
    %468 = vst [vmem:[#allocation2 + $0x10] sm:$0xff] %v464
    %469 = vst [vmem:[#allocation2 + $0x18] sm:$0xff] %v465
    %s470 = scalar_lea.vmem %s0, 32
    %v471 = vld [vmem:[%s470] sm:$0xff]
    %v472 = vld [vmem:[%s470 + $0x8] sm:$0xff]
    %v473 = vld [vmem:[%s470 + $0x10] sm:$0xff]
    %v474 = vld [vmem:[%s470 + $0x18] sm:$0xff]
    %v475 = vpack.c.bf16 %v472, %v471
    %v476 = vpack.c.bf16 %v474, %v473
    %477 = vmatprep.subr.bf16.mxu0 0
    %478 = vmatpush1.bf16.msra.mxu0 0
    %479 = vmatprep.subr.bf16.mxu0 0
    %480 = vmatpush1.bf16.msra.mxu0 0
    %481 = vmatprep.subr.bf16.mxu0 0
    %482 = vmatpush1.bf16.msra.mxu0 0
    %483 = vmatprep.subr.bf16.mxu0 0
    %484 = vmatpush1.bf16.msra.mxu0 0
    %485 = vmatprep.subr.bf16.mxu0 0
    %486 = vmatpush1.bf16.msra.mxu0 0
    %487 = vmatprep.subr.bf16.mxu0 0
    %488 = vmatpush1.bf16.msra.mxu0 0
    %489 = vmatprep.subr.bf16.mxu0 0
    %490 = vmatpush1.bf16.msra.mxu0 %v476
    %491 = vmatprep.subr.bf16.mxu0 0
    %492 = vmatpush1.bf16.msra.mxu0 %v475
    %493 = vmatprep.subr.bf16.mxu0 0
    %494 = vmatpush2.bf16.msra.mxu0 0
    %495 = vmatprep.subr.bf16.mxu0 0
    %496 = vmatpush2.bf16.msra.mxu0 0
    %497 = vmatprep.subr.bf16.mxu0 0
    %498 = vmatpush2.bf16.msra.mxu0 0
    %499 = vmatprep.subr.bf16.mxu0 0
    %500 = vmatpush2.bf16.msra.mxu0 0
    %501 = vmatprep.subr.bf16.mxu0 0
    %502 = vmatpush2.bf16.msra.mxu0 0
    %503 = vmatprep.subr.bf16.mxu0 0
    %504 = vmatpush2.bf16.msra.mxu0 0
    %505 = vmatprep.subr.bf16.mxu0 0
    %506 = vmatpush2.bf16.msra.mxu0 0
    %507 = vmatprep.subr.bf16.mxu0 0
    %508 = vmatpush2.bf16.msra.mxu0 0
    %509 = vmatprep.mubr.bf16.mxu0 0
    %510 = vmatmul.mubr.bf16.gmra.mxu0 %v91
    %v511 = vpop.f32.mrf.mxu0
    %v512 = vadd.f32 %v39, %v511
    %v513 = vpop.f32.mrf.mxu0
    %v514 = vpop.f32.mrf.mxu0
    %v515 = vadd.f32 %v44, %v514
    %v516 = vpop.f32.mrf.mxu0
    %517 = vmatprep.mubr.bf16.mxu0 0
    %518 = vmatmul.mubr.bf16.gmra.mxu0 %v94
    %v519 = vpop.f32.mrf.mxu0
    %v520 = vadd.f32 %v49, %v519
    %v521 = vpop.f32.mrf.mxu0
    %v522 = vpop.f32.mrf.mxu0
    %v523 = vadd.f32 %v54, %v522
    %v524 = vpop.f32.mrf.mxu0
    %525 = vmatprep.mubr.bf16.mxu0 0
    %526 = vmatmul.mubr.bf16.gmra.mxu0 %v97
    %v527 = vpop.f32.mrf.mxu0
    %v528 = vadd.f32 %v59, %v527
    %v529 = vpop.f32.mrf.mxu0
    %v530 = vpop.f32.mrf.mxu0
    %v531 = vadd.f32 %v64, %v530
    %v532 = vpop.f32.mrf.mxu0
    %533 = vmatprep.mubr.bf16.mxu0 0
    %534 = vmatmul.mubr.bf16.gmra.mxu0 %v100
    %v535 = vpop.f32.mrf.mxu0
    %v536 = vadd.f32 %v69, %v535
    %v537 = vpop.f32.mrf.mxu0
    %v538 = vpop.f32.mrf.mxu0
    %v539 = vpop.f32.mrf.mxu0
    %540 = vdwg.mxu0
    %v541 = vpack.c.bf16 %v515, %v515
    %v542 = vpack.c.bf16 %v523, %v520
    %v543 = vpack.c.bf16 %v531, %v528
    %v544 = vpack.c.bf16 %v536, %v536
    %v545 = vpack.c.bf16 %v512, %v512
    %546 = vxpose.xlu0.c.b16.start [1/8] %v545, 128
    %547 = vxpose.xlu0.c.b16.cont [2/8] 0, 128
    %548 = vxpose.xlu0.c.b16.cont [3/8] 0, 128
    %549 = vxpose.xlu0.c.b16.cont [4/8] 0, 128
    %550 = vxpose.xlu0.c.b16.cont [5/8] 0, 128
    %551 = vxpose.xlu0.c.b16.cont [6/8] 0, 128
    %552 = vxpose.xlu0.c.b16.cont [7/8] 0, 128
    %553 = vxpose.xlu0.c.b16.end [8/8] 0, 128
    %v554 = vpop.trf.xlu0
    %v555 = vpop.trf.xlu0
    %v556 = vpop.trf.xlu0
    %v557 = vpop.trf.xlu0
    %v558 = vpop.trf.xlu0
    %v559 = vpop.trf.xlu0
    %v560 = vpop.trf.xlu0
    %v561 = vpop.trf.xlu0
    %v563 = vsel %vm187, %v554, 0
    %v566 = vsel %vm187, %v555, 0
    %v569 = vsel %vm187, %v556, 0
    %v572 = vsel %vm187, %v557, 0
    %v575 = vsel %vm187, %v558, 0
    %v578 = vsel %vm187, %v559, 0
    %v581 = vsel %vm187, %v560, 0
    %v584 = vsel %vm187, %v561, 0
    %v587 = vsel %vm212, %v541, 0
    %589 = vmatprep.subr.bf16.mxu0 0
    %590 = vmatpush1.bf16.msra.mxu0 0
    %591 = vmatprep.subr.bf16.mxu0 0
    %592 = vmatpush1.bf16.msra.mxu0 0
    %593 = vmatprep.subr.bf16.mxu0 0
    %594 = vmatpush1.bf16.msra.mxu0 0
    %595 = vmatprep.subr.bf16.mxu0 0
    %596 = vmatpush1.bf16.msra.mxu0 0
    %597 = vmatprep.subr.bf16.mxu0 0
    %598 = vmatpush1.bf16.msra.mxu0 0
    %599 = vmatprep.subr.bf16.mxu0 0
    %600 = vmatpush1.bf16.msra.mxu0 0
    %601 = vmatprep.subr.bf16.mxu0 0
    %602 = vmatpush1.bf16.msra.mxu0 0
    %603 = vmatprep.subr.bf16.mxu0 0
    %604 = vmatpush1.bf16.msra.mxu0 %v587
    %605 = vmatprep.subr.bf16.mxu0 0
    %606 = vmatpush2.bf16.msra.mxu0 0
    %607 = vmatprep.subr.bf16.mxu0 0
    %608 = vmatpush2.bf16.msra.mxu0 0
    %609 = vmatprep.subr.bf16.mxu0 0
    %610 = vmatpush2.bf16.msra.mxu0 0
    %611 = vmatprep.subr.bf16.mxu0 0
    %612 = vmatpush2.bf16.msra.mxu0 0
    %613 = vmatprep.subr.bf16.mxu0 0
    %614 = vmatpush2.bf16.msra.mxu0 0
    %615 = vmatprep.subr.bf16.mxu0 0
    %616 = vmatpush2.bf16.msra.mxu0 0
    %617 = vmatprep.subr.bf16.mxu0 0
    %618 = vmatpush2.bf16.msra.mxu0 0
    %619 = vmatprep.subr.bf16.mxu0 0
    %620 = vmatpush2.bf16.msra.mxu0 0
    %621 = vmatprep.mubr.bf16.mxu0 0
    %622 = vmatmul.mubr.bf16.gmra.mxu0 %v563
    %v623 = vpop.f32.mrf.mxu0
    %v624 = vadd.f32 0.0, %v623
    %v625 = vpop.f32.mrf.mxu0
    %v626 = vpop.f32.mrf.mxu0
    %v627 = vadd.f32 0.0, %v626
    %v628 = vpop.f32.mrf.mxu0
    %629 = vmatprep.mubr.bf16.mxu0 0
    %630 = vmatmul.mubr.bf16.gmra.mxu0 %v566
    %v631 = vpop.f32.mrf.mxu0
    %v632 = vadd.f32 0.0, %v631
    %v633 = vpop.f32.mrf.mxu0
    %v634 = vpop.f32.mrf.mxu0
    %v635 = vadd.f32 0.0, %v634
    %v636 = vpop.f32.mrf.mxu0
    %637 = vmatprep.mubr.bf16.mxu0 0
    %638 = vmatmul.mubr.bf16.gmra.mxu0 %v569
    %v639 = vpop.f32.mrf.mxu0
    %v640 = vadd.f32 0.0, %v639
    %v641 = vpop.f32.mrf.mxu0
    %v642 = vpop.f32.mrf.mxu0
    %v643 = vadd.f32 0.0, %v642
    %v644 = vpop.f32.mrf.mxu0
    %645 = vmatprep.mubr.bf16.mxu0 0
    %646 = vmatmul.mubr.bf16.gmra.mxu0 %v572
    %v647 = vpop.f32.mrf.mxu0
    %v648 = vadd.f32 0.0, %v647
    %v649 = vpop.f32.mrf.mxu0
    %v650 = vpop.f32.mrf.mxu0
    %v651 = vadd.f32 0.0, %v650
    %v652 = vpop.f32.mrf.mxu0
    %653 = vmatprep.mubr.bf16.mxu0 0
    %654 = vmatmul.mubr.bf16.gmra.mxu0 %v575
    %v655 = vpop.f32.mrf.mxu0
    %v656 = vadd.f32 0.0, %v655
    %v657 = vpop.f32.mrf.mxu0
    %v658 = vpop.f32.mrf.mxu0
    %v659 = vadd.f32 0.0, %v658
    %v660 = vpop.f32.mrf.mxu0
    %661 = vmatprep.mubr.bf16.mxu0 0
    %662 = vmatmul.mubr.bf16.gmra.mxu0 %v578
    %v663 = vpop.f32.mrf.mxu0
    %v664 = vadd.f32 0.0, %v663
    %v665 = vpop.f32.mrf.mxu0
    %v666 = vpop.f32.mrf.mxu0
    %v667 = vadd.f32 0.0, %v666
    %v668 = vpop.f32.mrf.mxu0
    %669 = vmatprep.mubr.bf16.mxu0 0
    %670 = vmatmul.mubr.bf16.gmra.mxu0 %v581
    %v671 = vpop.f32.mrf.mxu0
    %v672 = vadd.f32 0.0, %v671
    %v673 = vpop.f32.mrf.mxu0
    %v674 = vpop.f32.mrf.mxu0
    %v675 = vadd.f32 0.0, %v674
    %v676 = vpop.f32.mrf.mxu0
    %677 = vmatprep.mubr.bf16.mxu0 0
    %678 = vmatmul.mubr.bf16.gmra.mxu0 %v584
    %v679 = vpop.f32.mrf.mxu0
    %v680 = vadd.f32 0.0, %v679
    %v681 = vpop.f32.mrf.mxu0
    %v682 = vpop.f32.mrf.mxu0
    %v683 = vadd.f32 0.0, %v682
    %v684 = vpop.f32.mrf.mxu0
    %685 = vdwg.mxu0
    %686 = vmax.xlane.f32.xlu0 %v624
    %v687 = vpop.xlane.xlu0 %686
    %688 = vmax.xlane.f32.xlu0 %v627
    %v689 = vpop.xlane.xlu0 %688
    %690 = vmax.xlane.f32.xlu0 %v632
    %v691 = vpop.xlane.xlu0 %690
    %692 = vmax.xlane.f32.xlu0 %v635
    %v693 = vpop.xlane.xlu0 %692
    %694 = vmax.xlane.f32.xlu0 %v640
    %v695 = vpop.xlane.xlu0 %694
    %696 = vmax.xlane.f32.xlu0 %v643
    %v697 = vpop.xlane.xlu0 %696
    %698 = vmax.xlane.f32.xlu0 %v648
    %v699 = vpop.xlane.xlu0 %698
    %700 = vmax.xlane.f32.xlu0 %v651
    %v701 = vpop.xlane.xlu0 %700
    %702 = vmax.xlane.f32.xlu0 %v656
    %v703 = vpop.xlane.xlu0 %702
    %704 = vmax.xlane.f32.xlu0 %v659
    %v705 = vpop.xlane.xlu0 %704
    %706 = vmax.xlane.f32.xlu0 %v664
    %v707 = vpop.xlane.xlu0 %706
    %708 = vmax.xlane.f32.xlu0 %v667
    %v709 = vpop.xlane.xlu0 %708
    %710 = vmax.xlane.f32.xlu0 %v672
    %v711 = vpop.xlane.xlu0 %710
    %712 = vmax.xlane.f32.xlu0 %v675
    %v713 = vpop.xlane.xlu0 %712
    %714 = vmax.xlane.f32.xlu0 %v680
    %v715 = vpop.xlane.xlu0 %714
    %716 = vmax.xlane.f32.xlu0 %v683
    %v717 = vpop.xlane.xlu0 %716
    %v718 = vsub.f32 %v624, %v687
    %v719 = vsub.f32 %v627, %v689
    %v720 = vsub.f32 %v632, %v691
    %v721 = vsub.f32 %v635, %v693
    %v722 = vsub.f32 %v640, %v695
    %v723 = vsub.f32 %v643, %v697
    %v724 = vsub.f32 %v648, %v699
    %v725 = vsub.f32 %v651, %v701
    %v726 = vsub.f32 %v656, %v703
    %v727 = vsub.f32 %v659, %v705
    %v728 = vsub.f32 %v664, %v707
    %v729 = vsub.f32 %v667, %v709
    %v730 = vsub.f32 %v672, %v711
    %v731 = vsub.f32 %v675, %v713
    %v732 = vsub.f32 %v680, %v715
    %v733 = vsub.f32 %v683, %v717
    %v734 = vmul.f32 %v718, 1.442695
    %v735 = vpow.pop %v734
    %v736 = vmul.f32 %v719, 1.442695
    %v737 = vpow.pop %v736
    %v738 = vmul.f32 %v720, 1.442695
    %v739 = vpow.pop %v738
    %v740 = vmul.f32 %v721, 1.442695
    %v741 = vpow.pop %v740
    %v742 = vmul.f32 %v722, 1.442695
    %v743 = vpow.pop %v742
    %v744 = vmul.f32 %v723, 1.442695
    %v745 = vpow.pop %v744
    %v746 = vmul.f32 %v724, 1.442695
    %v747 = vpow.pop %v746
    %v748 = vmul.f32 %v725, 1.442695
    %v749 = vpow.pop %v748
    %v750 = vmul.f32 %v726, 1.442695
    %v751 = vpow.pop %v750
    %v752 = vmul.f32 %v727, 1.442695
    %v753 = vpow.pop %v752
    %v754 = vmul.f32 %v728, 1.442695
    %v755 = vpow.pop %v754
    %v756 = vmul.f32 %v729, 1.442695
    %v757 = vpow.pop %v756
    %v758 = vmul.f32 %v730, 1.442695
    %v759 = vpow.pop %v758
    %v760 = vmul.f32 %v731, 1.442695
    %v761 = vpow.pop %v760
    %v762 = vmul.f32 %v732, 1.442695
    %v763 = vpow.pop %v762
    %v764 = vmul.f32 %v733, 1.442695
    %v765 = vpow.pop %v764
    %v766 = vpack.c.bf16 %v737, %v735
    %v767 = vpack.c.bf16 %v741, %v739
    %v768 = vpack.c.bf16 %v745, %v743
    %v769 = vpack.c.bf16 %v749, %v747
    %v770 = vpack.c.bf16 %v753, %v751
    %v771 = vpack.c.bf16 %v757, %v755
    %v772 = vpack.c.bf16 %v761, %v759
    %v773 = vpack.c.bf16 %v765, %v763
    %774 = vmatprep.subr.bf16.mxu0 0
    %775 = vmatpush1.bf16.xpose.msra.mxu0 %v773
    %776 = vmatprep.subr.bf16.mxu0 0
    %777 = vmatpush1.bf16.xpose.msra.mxu0 %v772
    %778 = vmatprep.subr.bf16.mxu0 0
    %779 = vmatpush1.bf16.xpose.msra.mxu0 %v771
    %780 = vmatprep.subr.bf16.mxu0 0
    %781 = vmatpush1.bf16.xpose.msra.mxu0 %v770
    %782 = vmatprep.subr.bf16.mxu0 0
    %783 = vmatpush1.bf16.xpose.msra.mxu0 %v769
    %784 = vmatprep.subr.bf16.mxu0 0
    %785 = vmatpush1.bf16.xpose.msra.mxu0 %v768
    %786 = vmatprep.subr.bf16.mxu0 0
    %787 = vmatpush1.bf16.xpose.msra.mxu0 %v767
    %788 = vmatprep.subr.bf16.mxu0 0
    %789 = vmatpush1.bf16.xpose.msra.mxu0 %v766
    %790 = vmatprep.subr.bf16.mxu0 0
    %791 = vmatpush2.bf16.xpose.msra.mxu0 0
    %792 = vmatprep.subr.bf16.mxu0 0
    %793 = vmatpush2.bf16.xpose.msra.mxu0 0
    %794 = vmatprep.subr.bf16.mxu0 0
    %795 = vmatpush2.bf16.xpose.msra.mxu0 0
    %796 = vmatprep.subr.bf16.mxu0 0
    %797 = vmatpush2.bf16.xpose.msra.mxu0 0
    %798 = vmatprep.subr.bf16.mxu0 0
    %799 = vmatpush2.bf16.xpose.msra.mxu0 0
    %800 = vmatprep.subr.bf16.mxu0 0
    %801 = vmatpush2.bf16.xpose.msra.mxu0 0
    %802 = vmatprep.subr.bf16.mxu0 0
    %803 = vmatpush2.bf16.xpose.msra.mxu0 0
    %804 = vmatprep.subr.bf16.mxu0 0
    %805 = vmatpush2.bf16.xpose.msra.mxu0 0
    %806 = vmatprep.mubr.bf16.mxu0 0
    %807 = vmatmul.mubr.bf16.gmra.mxu0 %v542
    %v808 = vpop.f32.mrf.mxu0
    %v809 = vadd.f32 0.0, %v808
    %v810 = vpop.f32.mrf.mxu0
    %v811 = vpop.f32.mrf.mxu0
    %v812 = vadd.f32 0.0, %v811
    %v813 = vpop.f32.mrf.mxu0
    %814 = vmatprep.mubr.bf16.mxu0 0
    %815 = vmatmul.mubr.bf16.gmra.mxu0 %v543
    %v816 = vpop.f32.mrf.mxu0
    %v817 = vadd.f32 0.0, %v816
    %v818 = vpop.f32.mrf.mxu0
    %v819 = vpop.f32.mrf.mxu0
    %v820 = vadd.f32 0.0, %v819
    %v821 = vpop.f32.mrf.mxu0
    %822 = vmatprep.mubr.bf16.mxu0 0
    %823 = vmatmul.mubr.bf16.gmra.mxu0 %v544
    %v824 = vpop.f32.mrf.mxu0
    %v825 = vadd.f32 0.0, %v824
    %v826 = vpop.f32.mrf.mxu0
    %v827 = vpop.f32.mrf.mxu0
    %v828 = vpop.f32.mrf.mxu0
    %829 = vdwg.mxu0
    %v830 = vrcp.pop %v825
    %v831 = vlaneseq
    %v832 = vshrl.u32 %v831, 7
    %v833 = vsub.s32 0, %v832
    %v834 = vrot.slane %v830, %v833
    %v835 = vmul.f32 %v809, %v834
    %v836 = vmul.f32 %v812, %v834
    %v837 = vmul.f32 %v817, %v834
    %v838 = vmul.f32 %v820, %v834
    %s839 = scalar_lea.vmem [#allocation2], 32
    %840 = vst [vmem:[%s839] sm:$0xff] %v835
    %841 = vst [vmem:[%s839 + $0x8] sm:$0xff] %v836
    %842 = vst [vmem:[%s839 + $0x10] sm:$0xff] %v837
    %843 = vst [vmem:[%s839 + $0x18] sm:$0xff] %v838
    // Predicated region
    $region14: #{tpu_custom_call.1} parent=1 // pred_check
      _
    $region15: #{tpu_custom_call.1} parent=1 // pred_check_branch
      %845 = sbr.rel (0) target = $region17
    $region16: #{tpu_custom_call.1} parent=1 // pred_region
      %s847 = ssub.s32 1024, 1024
      %848 = vsyncadd [#allocation3], %s847
      %s849 = sshll.u32 [#allocation2], 4
      %s850 = int_to_ptr.vmem [resolvable:$true] %s849
      %855 = dma.vmem_to_hbm [thread:$0]  %s850, 1024, %s3, [#allocation3], 128, 128, 8
    $region17: #{tpu_custom_call.1} parent=1 // pred_fallthru
      _
    // Predicated region
    $region18: #{tpu_custom_call.1} parent=1 // pred_check
      _
    $region19: #{tpu_custom_call.1} parent=1 // pred_check_branch
      %857 = sbr.rel (0) target = $region21
    $region20: #{tpu_custom_call.1} parent=1 // pred_region
      %858 = dma.done [#allocation3], 1024
    $region21: #{tpu_custom_call.1} parent=1 // pred_fallthru
      _
    %859 = vsyncpa [#allocation3], 1

</llo_original>
